<compile_context>
chip_gen: v7x
topology: tpu7x:2x2x1
jax: 0.10.0
libtpu: 0.0.40
codegen_flags: <defaults>
</compile_context>

<pallas_src>
from functools import partial

import jax
import jax.numpy as jnp
from jax.experimental import pallas as pl
from jax.experimental.pallas import tpu as pltpu


# ----------------------------- tiled projection matmul -----------------------------

def _matmul_kernel(x_ref, w_ref, o_ref, acc_ref):
    @pl.when(pl.program_id(2) == 0)
    def _init():
        acc_ref[...] = jnp.zeros_like(acc_ref)

    acc_ref[...] += jnp.dot(x_ref[...], w_ref[...],
                            preferred_element_type=jnp.float32)

    @pl.when(pl.program_id(2) == pl.num_programs(2) - 1)
    def _store():
        o_ref[...] = acc_ref[...].astype(o_ref.dtype)


def pallas_matmul(x, w, *, tm=256, tn=256, tk=256, out_dtype=jnp.bfloat16):
    """x: [M, K] @ w: [K, N] -> [M, N] (bf16 writeback by default, f32 accumulation).

    256-wide default tiles match the v6e/v7x 256x256 MXU; on v5e (4x128x128) they are
    still correct, just half-filled per push."""
    M, K = x.shape
    K2, N = w.shape
    assert K == K2
    tm, tn, tk = min(tm, M), min(tn, N), min(tk, K)
    assert M % tm == 0 and N % tn == 0 and K % tk == 0, "shapes must divide tiles"
    xb = x.astype(jnp.bfloat16)
    wb = w.astype(jnp.bfloat16)
    return pl.pallas_call(
        _matmul_kernel,
        out_shape=jax.ShapeDtypeStruct((M, N), out_dtype),
        grid=(M // tm, N // tn, K // tk),
        in_specs=[pl.BlockSpec((tm, tk), lambda i, j, k: (i, k)),
                  pl.BlockSpec((tk, tn), lambda i, j, k: (k, j))],
        out_specs=pl.BlockSpec((tm, tn), lambda i, j, k: (i, j)),
        scratch_shapes=[pltpu.VMEM((tm, tn), jnp.float32)],
        compiler_params=pltpu.CompilerParams(
            dimension_semantics=("parallel", "parallel", "arbitrary")),
    )(xb, wb)


# ----------------------------- fused multi-head flash attention -----------------------------

def _gat_attn_kernel(xw_ref, asrcT_ref, adst_ref, adj_ref, bias_ref,
                     out_ref, m_ref, d_ref,
                     m_sc, l_sc, acc_sc, *, heads, ch, negative_slope):
    """Grid = (dst blocks [parallel], src blocks [arbitrary]); online softmax over src.

    xw_ref    [TS, H*C]   bf16  transformed src-node features (streamed per src block)
    asrcT_ref [H, TS]     f32   per-src-node attention logits (this src block)
    adst_ref  [TD, H]     f32   per-dst-node attention logits (this dst tile)
    adj_ref   [TD, TS]    int8  adjacency mask block, row = dst, col = src
    bias_ref  [1, H*C]    f32
    out_ref   [TD, H*C]   f32   aggregated output + bias (written at last src block)
    m_ref     [TD, H]     f32   per-row masked-score max (for per-edge alpha recovery)
    d_ref     [TD, H]     f32   per-row softmax denominator
    m_sc/l_sc [TD, H]     f32   running max / denominator (scratch)
    acc_sc    [TD, H*C]   f32   running un-normalized aggregation (scratch)
    """
    si = pl.program_id(1)

    @pl.when(si == 0)
    def _init():
        m_sc[...] = jnp.full_like(m_sc, -jnp.inf)
        l_sc[...] = jnp.zeros_like(l_sc)
        acc_sc[...] = jnp.zeros_like(acc_sc)

    mask = adj_ref[...].astype(jnp.float32) > 0.0          # [TD, TS]
    neg_fill = jnp.float32(-1e30)

    m_prev_all = m_sc[...]                                  # [TD, H]
    l_prev_all = l_sc[...]                                  # [TD, H]
    m_new_cols, l_new_cols = [], []
    for h in range(heads):
        a_src = asrcT_ref[h:h + 1, :]                       # [1, TS]
        a_dst = adst_ref[:, h:h + 1]                        # [TD, 1]
        s = a_dst + a_src                                   # [TD, TS]
        s = jnp.where(s > 0, s, negative_slope * s)         # LeakyReLU(0.2)
        s = jnp.where(mask, s, neg_fill)

        m_prev = m_prev_all[:, h:h + 1]                     # [TD, 1]
        m_new = jnp.maximum(m_prev, jnp.max(s, axis=-1, keepdims=True))
        corr = jnp.exp(m_prev - m_new)                      # exp(-inf)=0 at first block
        p = jnp.exp(s - m_new)                              # un-normalized probabilities

        l_new_cols.append(corr * l_prev_all[:, h:h + 1]
                          + jnp.sum(p, axis=-1, keepdims=True))
        m_new_cols.append(m_new)
        # un-normalized aggregation; 1/denominator is folded in at finalize only
        acc_sc[:, h * ch:(h + 1) * ch] = (
            corr * acc_sc[:, h * ch:(h + 1) * ch]
            + jnp.dot(p.astype(jnp.bfloat16), xw_ref[:, h * ch:(h + 1) * ch],
                      preferred_element_type=jnp.float32))

    m_sc[...] = jnp.concatenate(m_new_cols, axis=-1)        # tiny [TD, H] stores
    l_sc[...] = jnp.concatenate(l_new_cols, axis=-1)

    @pl.when(si == pl.num_programs(1) - 1)
    def _finalize():
        inv_l = pl.reciprocal(l_sc[...], approx=True)       # EUP vrcp, [TD, H]
        for h in range(heads):
            out_ref[:, h * ch:(h + 1) * ch] = (
                acc_sc[:, h * ch:(h + 1) * ch] * inv_l[:, h:h + 1]
                + bias_ref[:, h * ch:(h + 1) * ch])
        m_ref[...] = m_sc[...]
        d_ref[...] = l_sc[...]


def _pick_dst_tile(n):
    # prefer >= 2 grid steps so the "parallel" axis spans both v7x TensorCores
    for t in (256, 128, 64, 32):
        if n % t == 0 and n // t >= 2:
            return t
    for t in (256, 128, 64, 32):
        if n % t == 0:
            return t
    return n


def _pick_src_tile(n):
    for t in (512, 256, 128):
        if n % t == 0:
            return t
    return n


def pallas_gat_attention(xw, a_src, a_dst, adj, bias, heads, *,
                         negative_slope=0.2, dst_tile=None, src_tile=None):
    """Masked multi-head attention + aggregation, flash-tiled over (dst, src) node blocks.

    xw:   [N, H*C] (bf16 preferred)   a_src/a_dst: [N, H] f32   adj: [N, N] int8   bias: [H*C]
    returns out [N, H*C] f32, m [N, H] f32, denom [N, H] f32.
    """
    N, HC = xw.shape
    C = HC // heads
    if dst_tile is None:
        dst_tile = _pick_dst_tile(N)
    if src_tile is None:
        src_tile = _pick_src_tile(N)
    assert N % dst_tile == 0 and N % src_tile == 0
    assert dst_tile % 32 == 0 or dst_tile == N, "int8 sublane tiling needs dst_tile % 32 == 0"
    assert src_tile % 128 == 0 or src_tile == N, "lane tiling needs src_tile % 128 == 0"

    xw_bf = xw.astype(jnp.bfloat16)
    a_srcT = a_src.T.astype(jnp.float32)            # [H, N]
    a_dst_f = a_dst.astype(jnp.float32)             # [N, H]
    adj_i8 = adj.astype(jnp.int8)
    bias2d = bias.reshape(1, HC).astype(jnp.float32)

    # explicit VMEM budget: double-buffered streamed tiles + outputs + scratch + temps
    est = 2 * (src_tile * HC * 2            # xw block (bf16)
               + heads * src_tile * 4       # a_src^T block
               + dst_tile * heads * 4       # a_dst block
               + dst_tile * src_tile * 1    # adjacency block (int8)
               + HC * 4)                    # bias
    est += 2 * (dst_tile * HC * 4 + 2 * dst_tile * heads * 4)      # outputs
    est += dst_tile * HC * 4 + 2 * dst_tile * heads * 4            # scratch
    est += 4 * dst_tile * src_tile * 4                             # s/p/mask temporaries
    vmem_limit = int(min(100 * 1024 * 1024, max(32 * 1024 * 1024, 2 * est + (8 << 20))))

    kernel = partial(_gat_attn_kernel, heads=heads, ch=C,
                     negative_slope=negative_slope)
    out, m, d = pl.pallas_call(
        kernel,
        out_shape=(jax.ShapeDtypeStruct((N, HC), jnp.float32),
                   jax.ShapeDtypeStruct((N, heads), jnp.float32),
                   jax.ShapeDtypeStruct((N, heads), jnp.float32)),
        grid=(N // dst_tile, N // src_tile),
        in_specs=[pl.BlockSpec((src_tile, HC), lambda i, j: (j, 0)),        # xw (src block)
                  pl.BlockSpec((heads, src_tile), lambda i, j: (0, j)),     # a_src^T
                  pl.BlockSpec((dst_tile, heads), lambda i, j: (i, 0)),     # a_dst
                  pl.BlockSpec((dst_tile, src_tile), lambda i, j: (i, j)),  # adjacency int8
                  pl.BlockSpec((1, HC), lambda i, j: (0, 0))],              # bias
        out_specs=(pl.BlockSpec((dst_tile, HC), lambda i, j: (i, 0)),
                   pl.BlockSpec((dst_tile, heads), lambda i, j: (i, 0)),
                   pl.BlockSpec((dst_tile, heads), lambda i, j: (i, 0))),
        scratch_shapes=[pltpu.VMEM((dst_tile, heads), jnp.float32),   # running max
                        pltpu.VMEM((dst_tile, heads), jnp.float32),   # running denom
                        pltpu.VMEM((dst_tile, HC), jnp.float32)],     # running acc
        compiler_params=pltpu.CompilerParams(
            dimension_semantics=("parallel", "arbitrary"),
            vmem_limit_bytes=vmem_limit),
    )(xw_bf, a_srcT, a_dst_f, adj_i8, bias2d)
    return out, m, d


# ----------------------------- model glue -----------------------------

def init_gat_params(key, dim, heads, num_layers):
    """concat=False in GATMODEL.__init__ => out_channels = dim // heads,
    so every layer maps [N, dim] -> [N, dim] (heads concatenated)."""
    assert dim % heads == 0
    C = dim // heads
    params = []
    for _ in range(num_layers):
        key, k1, k2, k3 = jax.random.split(key, 4)
        W = jax.random.normal(k1, (dim, heads * C), dtype=jnp.float32) / jnp.sqrt(float(dim))
        att_src = jax.random.normal(k2, (heads, C), dtype=jnp.float32) * 0.1
        att_dst = jax.random.normal(k3, (heads, C), dtype=jnp.float32) * 0.1
        bias = jnp.zeros((heads * C,), dtype=jnp.float32)
        params.append(dict(W=W, att_src=att_src, att_dst=att_dst, bias=bias))
    return params


def gat_model_forward(params, x, edge_index, heads, *, add_self_loops=True,
                      negative_slope=0.2, dst_tile=None, src_tile=None):
    """Matches GATMODEL.forward: returns (x, [(edge_index_sl, alpha_e), ...])."""
    N = x.shape[0]
    src, dst = edge_index[0], edge_index[1]
    if add_self_loops:
        loop = jnp.arange(N, dtype=edge_index.dtype)
        src = jnp.concatenate([src, loop])
        dst = jnp.concatenate([dst, loop])
    edge_index_sl = jnp.stack([src, dst], axis=0)

    # int8 adjacency mask built ONCE (reused by every layer): adj[dst, src] = 1.
    # TODO(synk): duplicate / multi-edges collapse to one dense entry; only simple
    #             graphs match PyG scatter-softmax semantics exactly.
    adj = jnp.zeros((N, N), dtype=jnp.int8).at[dst, src].set(1)

    attention_weights = []
    for p in params:
        HC = p['W'].shape[1]
        C = HC // heads
        xw = pallas_matmul(x, p['W'])                          # [N, H*C] bf16 writeback
        xw_h = xw.astype(jnp.float32).reshape(N, heads, C)
        a_src = jnp.einsum('nhc,hc->nh', xw_h, p['att_src'])   # [N, H] (tiny)
        a_dst = jnp.einsum('nhc,hc->nh', xw_h, p['att_dst'])   # [N, H] (tiny)

        out, m_row, d_row = pallas_gat_attention(
            xw, a_src, a_dst, adj, p['bias'], heads,
            negative_slope=negative_slope, dst_tile=dst_tile, src_tile=src_tile)
        x = out                                                # bias already added in-kernel

        # Per-edge attention coefficients recovered from per-row softmax stats:
        # no dense [H, N, N] alpha is ever materialized / written to HBM.
        s_e = a_dst[dst] + a_src[src]                          # [E, H]
        s_e = jnp.where(s_e > 0, s_e, negative_slope * s_e)
        denom = jnp.maximum(d_row[dst], 1e-30)                 # guard isolated rows
        alpha_e = jnp.exp(s_e - m_row[dst]) / denom            # [E, H]
        attention_weights.append((edge_index_sl, alpha_e))
    return x, attention_weights


# ----------------------------- pure-JAX reference (demo check only) -----------------------------

def _gat_reference(params, x, adj_bool, heads, negative_slope=0.2):
    N = x.shape[0]
    for p in params:
        HC = p['W'].shape[1]
        C = HC // heads
        xw = x @ p['W']
        xw_h = xw.reshape(N, heads, C)
        a_src = jnp.einsum('nhc,hc->nh', xw_h, p['att_src'])
        a_dst = jnp.einsum('nhc,hc->nh', xw_h, p['att_dst'])
        s = a_dst[:, None, :] + a_src[None, :, :]              # [dst, src, H]
        s = jnp.where(s > 0, s, negative_slope * s)
        s = jnp.where(adj_bool[:, :, None], s, -jnp.inf)
        alpha = jax.nn.softmax(s, axis=1)
        x = jnp.einsum('ijh,jhc->ihc', alpha, xw_h).reshape(N, HC) + p['bias']
    return x


# ----------------------------- demo -----------------------------

if __name__ == "__main__":
    N = 256         # nodes
    dim = 64        # feature dim
    heads = 4       # params['heads']
    num_layers = 2  # params['num_layers']

    key = jax.random.PRNGKey(0)
    key, kx, kp = jax.random.split(key, 3)

    x = jax.random.normal(kx, (N, dim), dtype=jnp.float32)

    # deterministic graph: bidirectional ring
    i = jnp.arange(N, dtype=jnp.int32)
    src = jnp.concatenate([i, (i + 1) % N])
    dst = jnp.concatenate([(i + 1) % N, i])
    edge_index = jnp.stack([src, dst], axis=0)  # [2, 2N]

    params = init_gat_params(kp, dim, heads, num_layers)

    # dst_tile=128 -> 2 "parallel" dst steps; src_tile=128 -> 2 online-softmax src steps.
    x_out, attn_ws = gat_model_forward(params, x, edge_index, heads,
                                       add_self_loops=True,
                                       dst_tile=128, src_tile=128)

    jax.block_until_ready(x_out)
    for ei, al in attn_ws:
        jax.block_until_ready(ei)
        jax.block_until_ready(al)

    E_total = 2 * N + N   # edges + self loops
    assert x_out.shape == (N, dim)
    assert bool(jnp.all(jnp.isfinite(x_out)))
    for ei, al in attn_ws:
        assert ei.shape == (2, E_total)
        assert al.shape == (E_total, heads)
        assert bool(jnp.all(jnp.isfinite(al)))
        # each destination's incoming attention sums to 1 per head
        row_sum = jnp.zeros((N, heads), dtype=jnp.float32).at[ei[1]].add(al)
        assert bool(jnp.all(jnp.abs(row_sum - 1.0) < 2e-3))

    # loose end-to-end reference check (bf16 MXU operands + EUP approx reciprocal in kernel)
    loop = jnp.arange(N, dtype=jnp.int32)
    src_sl = jnp.concatenate([src, loop])
    dst_sl = jnp.concatenate([dst, loop])
    adj_bool = jnp.zeros((N, N), dtype=jnp.bool_).at[dst_sl, src_sl].set(True)
    x_ref = _gat_reference(params, x, adj_bool, heads)
    assert bool(jnp.max(jnp.abs(x_out - x_ref)) < 0.15)

    print("KERNEL_OK")
</pallas_src>

<mosaic_0001>
module attributes {stable_mosaic.version = 11 : i64} {
  func.func @_matmul_kernel(%arg0: i32, %arg1: i32, %arg2: i32, %arg3: memref<256x64xbf16, #tpu.memory_space<vmem>>, %arg4: memref<64x64xbf16, #tpu.memory_space<vmem>>, %arg5: memref<256x64xbf16, #tpu.memory_space<vmem>>, %arg6: memref<256x64xf32, #tpu.memory_space<vmem>>) attributes {dimension_semantics = [#tpu.dimension_semantics<parallel>, #tpu.dimension_semantics<parallel>, #tpu.dimension_semantics<arbitrary>], iteration_bounds = array<i64: 1, 1, 1>, scalar_prefetch = 0 : i64, scratch_operands = 1 : i64, tpu.core_type = #tpu.core_type<tc>, window_params = [{transform_indices = @transform_0, window_bounds = array<i64: 256, 64>}, {transform_indices = @transform_1, window_bounds = array<i64: 64, 64>}, {transform_indices = @transform_2, window_bounds = array<i64: 256, 64>}]} {
    %c0_i32 = arith.constant 0 : i32
    %0 = arith.cmpi eq, %arg2, %c0_i32 : i32
    %1 = arith.extui %0 : i1 to i32
    %c0_i32_0 = arith.constant 0 : i32
    %2 = arith.cmpi ne, %1, %c0_i32_0 : i32
    scf.if %2 {
      %cst_10 = arith.constant 0.000000e+00 : f32
      %12 = vector.broadcast %cst_10 : f32 to vector<256x64xf32>
      %c0_11 = arith.constant 0 : index
      %c0_12 = arith.constant 0 : index
      %13 = vector.load %arg6[%c0_11, %c0_12] : memref<256x64xf32, #tpu.memory_space<vmem>>, vector<256x64xf32>
      tpu.vector_store %arg6[%c0_11, %c0_12], %12 {strides = array<i32>} : memref<256x64xf32, #tpu.memory_space<vmem>>, vector<256x64xf32>,
    } else {
    }
    %c0 = arith.constant 0 : index
    %c0_1 = arith.constant 0 : index
    %3 = vector.load %arg6[%c0, %c0_1] : memref<256x64xf32, #tpu.memory_space<vmem>>, vector<256x64xf32>
    %c0_2 = arith.constant 0 : index
    %c0_3 = arith.constant 0 : index
    %4 = vector.load %arg3[%c0_2, %c0_3] : memref<256x64xbf16, #tpu.memory_space<vmem>>, vector<256x64xbf16>
    %c0_4 = arith.constant 0 : index
    %c0_5 = arith.constant 0 : index
    %5 = vector.load %arg4[%c0_4, %c0_5] : memref<64x64xbf16, #tpu.memory_space<vmem>>, vector<64x64xbf16>
    %cst = arith.constant dense<0.000000e+00> : vector<256x64xf32>
    %6 = tpu.matmul %4, %5, %cst {dimension_numbers = #tpu.dot_dimension_numbers<[1], [0], [0], [1], [0, 0, 1, 1], [], []>} : vector<256x64xbf16>, vector<64x64xbf16>, vector<256x64xf32> -> vector<256x64xf32>
    %7 = arith.addf %3, %6 : vector<256x64xf32>
    %c0_6 = arith.constant 0 : index
    %c0_7 = arith.constant 0 : index
    %8 = vector.load %arg6[%c0_6, %c0_7] : memref<256x64xf32, #tpu.memory_space<vmem>>, vector<256x64xf32>
    tpu.vector_store %arg6[%c0_6, %c0_7], %7 {strides = array<i32>} : memref<256x64xf32, #tpu.memory_space<vmem>>, vector<256x64xf32>,
    %c0_i32_8 = arith.constant 0 : i32
    %9 = arith.cmpi eq, %arg2, %c0_i32_8 : i32
    %10 = arith.extui %9 : i1 to i32
    %c0_i32_9 = arith.constant 0 : i32
    %11 = arith.cmpi ne, %10, %c0_i32_9 : i32
    scf.if %11 {
      %c0_10 = arith.constant 0 : index
      %c0_11 = arith.constant 0 : index
      %12 = vector.load %arg6[%c0_10, %c0_11] : memref<256x64xf32, #tpu.memory_space<vmem>>, vector<256x64xf32>
      %13 = arith.truncf %12 : vector<256x64xf32> to vector<256x64xbf16>
      %c0_12 = arith.constant 0 : index
      %c0_13 = arith.constant 0 : index
      %14 = vector.load %arg5[%c0_12, %c0_13] : memref<256x64xbf16, #tpu.memory_space<vmem>>, vector<256x64xbf16>
      tpu.vector_store %arg5[%c0_12, %c0_13], %13 {strides = array<i32>} : memref<256x64xbf16, #tpu.memory_space<vmem>>, vector<256x64xbf16>,
    } else {
    }
    return
  }
  func.func @transform_0(%arg0: i32, %arg1: i32, %arg2: i32) -> (i32, i32) {
    %c0_i32 = arith.constant 0 : i32
    return %arg0, %arg2 : i32, i32
  }
  func.func @transform_1(%arg0: i32, %arg1: i32, %arg2: i32) -> (i32, i32) {
    %c0_i32 = arith.constant 0 : i32
    return %arg2, %arg1 : i32, i32
  }
  func.func @transform_2(%arg0: i32, %arg1: i32, %arg2: i32) -> (i32, i32) {
    %c0_i32 = arith.constant 0 : i32
    return %arg0, %arg1 : i32, i32
  }
}

</mosaic_0001>

<llo_original>
// kernel: tpu_custom_call.1
$region0: #{tpu_custom_call.1}
  #allocation0 [shape = 'u32[]', space=smem, size = 0x4, offset = 0x4, fixed_abs, tag = 'smem constant byte address 0x4 - core index']
  #allocation1 [shape = 'u32[144,128]{1,0:T(1,128)}', space=vmem, size = 0x12000, scoped, tag = 'internal scratch']
  #allocation2 [shape = 'f32[256,64]{1,0:T(8,128)}', space=vmem, size = 0x20000, scoped, tag = 'scratch operand']
  %s0 = inlined_call_operand.vmem [shape: bf16[256,64], index: 0, kind: input, shape index: {}]
  %s1 = inlined_call_operand.vmem [shape: bf16[64,64], index: 1, kind: input, shape index: {}]
  %s2 = inlined_call_operand.vmem [shape: bf16[256,64], index: 2, kind: output, shape index: {}]
  %s3 = sld [smem:[#allocation0]]
  $region26: #{tpu_custom_call.1} parent=0
    _
  %s5 = ssub.s32 1, %s3
  %s6 = scalar_select 0, %s5, %s3
  // Predicated region
  $region2: #{tpu_custom_call.1} parent=0 // pred_check
    _
  $region3: #{tpu_custom_call.1} parent=0 // pred_check_branch
    %8 = sbr.rel (0) target = $region5
  $region4: #{tpu_custom_call.1} parent=0 // pred_region
    _
  $region5: #{tpu_custom_call.1} parent=0 // pred_fallthru
    _
  // Predicated region
  $region6: #{tpu_custom_call.1} parent=0 // pred_check
    _
  $region7: #{tpu_custom_call.1} parent=0 // pred_check_branch
    %10 = sbr.rel (0) target = $region9
  $region8: #{tpu_custom_call.1} parent=0 // pred_region
    _
  $region9: #{tpu_custom_call.1} parent=0 // pred_fallthru
    _
  %p12 = scmp.eq.s32.totalorder 0, 0
  // Predicated region
  $region10: #{tpu_custom_call.1} parent=0 // pred_check
    %p13 = pneg %p12
  $region11: #{tpu_custom_call.1} parent=0 // pred_check_branch
    %15 = sbr.rel (%p13) target = $region13
  $region12: #{tpu_custom_call.1} parent=0 // pred_region
    %vm16 = vcmask 523264
    %17 = vst.msk [vmem:[#allocation2] sm:$0xff] %vm16, 0.0
    %18 = vst.msk [vmem:[#allocation2 + $0x8] sm:$0xff] %vm16, 0.0
    %19 = vst.msk [vmem:[#allocation2 + $0x10] sm:$0xff] %vm16, 0.0
    %20 = vst.msk [vmem:[#allocation2 + $0x18] sm:$0xff] %vm16, 0.0
    %21 = vst.msk [vmem:[#allocation2 + $0x20] sm:$0xff] %vm16, 0.0
    %22 = vst.msk [vmem:[#allocation2 + $0x28] sm:$0xff] %vm16, 0.0
    %23 = vst.msk [vmem:[#allocation2 + $0x30] sm:$0xff] %vm16, 0.0
    %24 = vst.msk [vmem:[#allocation2 + $0x38] sm:$0xff] %vm16, 0.0
    %25 = vst.msk [vmem:[#allocation2 + $0x40] sm:$0xff] %vm16, 0.0
    %26 = vst.msk [vmem:[#allocation2 + $0x48] sm:$0xff] %vm16, 0.0
    %27 = vst.msk [vmem:[#allocation2 + $0x50] sm:$0xff] %vm16, 0.0
    %28 = vst.msk [vmem:[#allocation2 + $0x58] sm:$0xff] %vm16, 0.0
    %29 = vst.msk [vmem:[#allocation2 + $0x60] sm:$0xff] %vm16, 0.0
    %30 = vst.msk [vmem:[#allocation2 + $0x68] sm:$0xff] %vm16, 0.0
    %31 = vst.msk [vmem:[#allocation2 + $0x70] sm:$0xff] %vm16, 0.0
    %32 = vst.msk [vmem:[#allocation2 + $0x78] sm:$0xff] %vm16, 0.0
    %33 = vst.msk [vmem:[#allocation2 + $0x80] sm:$0xff] %vm16, 0.0
    %34 = vst.msk [vmem:[#allocation2 + $0x88] sm:$0xff] %vm16, 0.0
    %35 = vst.msk [vmem:[#allocation2 + $0x90] sm:$0xff] %vm16, 0.0
    %36 = vst.msk [vmem:[#allocation2 + $0x98] sm:$0xff] %vm16, 0.0
    %37 = vst.msk [vmem:[#allocation2 + $0xa0] sm:$0xff] %vm16, 0.0
    %38 = vst.msk [vmem:[#allocation2 + $0xa8] sm:$0xff] %vm16, 0.0
    %39 = vst.msk [vmem:[#allocation2 + $0xb0] sm:$0xff] %vm16, 0.0
    %40 = vst.msk [vmem:[#allocation2 + $0xb8] sm:$0xff] %vm16, 0.0
    %41 = vst.msk [vmem:[#allocation2 + $0xc0] sm:$0xff] %vm16, 0.0
    %42 = vst.msk [vmem:[#allocation2 + $0xc8] sm:$0xff] %vm16, 0.0
    %43 = vst.msk [vmem:[#allocation2 + $0xd0] sm:$0xff] %vm16, 0.0
    %44 = vst.msk [vmem:[#allocation2 + $0xd8] sm:$0xff] %vm16, 0.0
    %45 = vst.msk [vmem:[#allocation2 + $0xe0] sm:$0xff] %vm16, 0.0
    %46 = vst.msk [vmem:[#allocation2 + $0xe8] sm:$0xff] %vm16, 0.0
    %47 = vst.msk [vmem:[#allocation2 + $0xf0] sm:$0xff] %vm16, 0.0
    %48 = vst.msk [vmem:[#allocation2 + $0xf8] sm:$0xff] %vm16, 0.0
  $region13: #{tpu_custom_call.1} parent=0 // pred_fallthru
    _
  %v49 = vld [vmem:[#allocation2] sm:$0xff]
  %v50 = vld [vmem:[#allocation2 + $0x8] sm:$0xff]
  %v51 = vld [vmem:[#allocation2 + $0x10] sm:$0xff]
  %v52 = vld [vmem:[#allocation2 + $0x18] sm:$0xff]
  %v53 = vld [vmem:[#allocation2 + $0x20] sm:$0xff]
  %v54 = vld [vmem:[#allocation2 + $0x28] sm:$0xff]
  %v55 = vld [vmem:[#allocation2 + $0x30] sm:$0xff]
  %v56 = vld [vmem:[#allocation2 + $0x38] sm:$0xff]
  %v57 = vld [vmem:[#allocation2 + $0x40] sm:$0xff]
  %v58 = vld [vmem:[#allocation2 + $0x48] sm:$0xff]
  %v59 = vld [vmem:[#allocation2 + $0x50] sm:$0xff]
  %v60 = vld [vmem:[#allocation2 + $0x58] sm:$0xff]
  %v61 = vld [vmem:[#allocation2 + $0x60] sm:$0xff]
  %v62 = vld [vmem:[#allocation2 + $0x68] sm:$0xff]
  %v63 = vld [vmem:[#allocation2 + $0x70] sm:$0xff]
  %v64 = vld [vmem:[#allocation2 + $0x78] sm:$0xff]
  %v65 = vld [vmem:[#allocation2 + $0x80] sm:$0xff]
  %v66 = vld [vmem:[#allocation2 + $0x88] sm:$0xff]
  %v67 = vld [vmem:[#allocation2 + $0x90] sm:$0xff]
  %v68 = vld [vmem:[#allocation2 + $0x98] sm:$0xff]
  %v69 = vld [vmem:[#allocation2 + $0xa0] sm:$0xff]
  %v70 = vld [vmem:[#allocation2 + $0xa8] sm:$0xff]
  %v71 = vld [vmem:[#allocation2 + $0xb0] sm:$0xff]
  %v72 = vld [vmem:[#allocation2 + $0xb8] sm:$0xff]
  %v73 = vld [vmem:[#allocation2 + $0xc0] sm:$0xff]
  %v74 = vld [vmem:[#allocation2 + $0xc8] sm:$0xff]
  %v75 = vld [vmem:[#allocation2 + $0xd0] sm:$0xff]
  %v76 = vld [vmem:[#allocation2 + $0xd8] sm:$0xff]
  %v77 = vld [vmem:[#allocation2 + $0xe0] sm:$0xff]
  %v78 = vld [vmem:[#allocation2 + $0xe8] sm:$0xff]
  %v79 = vld [vmem:[#allocation2 + $0xf0] sm:$0xff]
  %v80 = vld [vmem:[#allocation2 + $0xf8] sm:$0xff]
  %v81 = vld [vmem:[%s0] sm:$0xf]
  %v82 = vld [vmem:[%s0 + $0x4] sm:$0xf]
  %v83 = vld [vmem:[%s0 + $0x8] sm:$0xf]
  %v84 = vld [vmem:[%s0 + $0xc] sm:$0xf]
  %v85 = vld [vmem:[%s0 + $0x10] sm:$0xf]
  %v86 = vld [vmem:[%s0 + $0x14] sm:$0xf]
  %v87 = vld [vmem:[%s0 + $0x18] sm:$0xf]
  %v88 = vld [vmem:[%s0 + $0x1c] sm:$0xf]
  %v89 = vld [vmem:[%s0 + $0x20] sm:$0xf]
  %v90 = vld [vmem:[%s0 + $0x24] sm:$0xf]
  %v91 = vld [vmem:[%s0 + $0x28] sm:$0xf]
  %v92 = vld [vmem:[%s0 + $0x2c] sm:$0xf]
  %v93 = vld [vmem:[%s0 + $0x30] sm:$0xf]
  %v94 = vld [vmem:[%s0 + $0x34] sm:$0xf]
  %v95 = vld [vmem:[%s0 + $0x38] sm:$0xf]
  %v96 = vld [vmem:[%s0 + $0x3c] sm:$0xf]
  %v97 = vld [vmem:[%s0 + $0x40] sm:$0xf]
  %v98 = vld [vmem:[%s0 + $0x44] sm:$0xf]
  %v99 = vld [vmem:[%s0 + $0x48] sm:$0xf]
  %v100 = vld [vmem:[%s0 + $0x4c] sm:$0xf]
  %v101 = vld [vmem:[%s0 + $0x50] sm:$0xf]
  %v102 = vld [vmem:[%s0 + $0x54] sm:$0xf]
  %v103 = vld [vmem:[%s0 + $0x58] sm:$0xf]
  %v104 = vld [vmem:[%s0 + $0x5c] sm:$0xf]
  %v105 = vld [vmem:[%s0 + $0x60] sm:$0xf]
  %v106 = vld [vmem:[%s0 + $0x64] sm:$0xf]
  %v107 = vld [vmem:[%s0 + $0x68] sm:$0xf]
  %v108 = vld [vmem:[%s0 + $0x6c] sm:$0xf]
  %v109 = vld [vmem:[%s0 + $0x70] sm:$0xf]
  %v110 = vld [vmem:[%s0 + $0x74] sm:$0xf]
  %v111 = vld [vmem:[%s0 + $0x78] sm:$0xf]
  %v112 = vld [vmem:[%s0 + $0x7c] sm:$0xf]
  %v113 = vld [vmem:[%s1] sm:$0xf]
  %v114 = vld [vmem:[%s1 + $0x4] sm:$0xf]
  %v115 = vld [vmem:[%s1 + $0x8] sm:$0xf]
  %v116 = vld [vmem:[%s1 + $0xc] sm:$0xf]
  %v117 = vld [vmem:[%s1 + $0x10] sm:$0xf]
  %v118 = vld [vmem:[%s1 + $0x14] sm:$0xf]
  %v119 = vld [vmem:[%s1 + $0x18] sm:$0xf]
  %v120 = vld [vmem:[%s1 + $0x1c] sm:$0xf]
  %v153 = vunpack.c.l.b16 %v81
  %v154 = vunpack.c.l.b16 %v82
  %v155 = vunpack.c.l.b16 %v83
  %v156 = vunpack.c.l.b16 %v84
  %v157 = vunpack.c.l.b16 %v85
  %v158 = vunpack.c.l.b16 %v86
  %v159 = vunpack.c.l.b16 %v87
  %v160 = vunpack.c.l.b16 %v88
  %v161 = vunpack.c.l.b16 %v89
  %v162 = vunpack.c.l.b16 %v90
  %v163 = vunpack.c.l.b16 %v91
  %v164 = vunpack.c.l.b16 %v92
  %v165 = vunpack.c.l.b16 %v93
  %v166 = vunpack.c.l.b16 %v94
  %v167 = vunpack.c.l.b16 %v95
  %v168 = vunpack.c.l.b16 %v96
  %v169 = vunpack.c.l.b16 %v97
  %v170 = vunpack.c.l.b16 %v98
  %v171 = vunpack.c.l.b16 %v99
  %v172 = vunpack.c.l.b16 %v100
  %v173 = vunpack.c.l.b16 %v101
  %v174 = vunpack.c.l.b16 %v102
  %v175 = vunpack.c.l.b16 %v103
  %v176 = vunpack.c.l.b16 %v104
  %v177 = vunpack.c.l.b16 %v105
  %v178 = vunpack.c.l.b16 %v106
  %v179 = vunpack.c.l.b16 %v107
  %v180 = vunpack.c.l.b16 %v108
  %v181 = vunpack.c.l.b16 %v109
  %v182 = vunpack.c.l.b16 %v110
  %v183 = vunpack.c.l.b16 %v111
  %v184 = vunpack.c.l.b16 %v112
  %v185 = vpack.c.b16 %v154, %v153
  %v186 = vpack.c.b16 %v156, %v155
  %v187 = vpack.c.b16 %v158, %v157
  %v188 = vpack.c.b16 %v160, %v159
  %v189 = vpack.c.b16 %v162, %v161
  %v190 = vpack.c.b16 %v164, %v163
  %v191 = vpack.c.b16 %v166, %v165
  %v192 = vpack.c.b16 %v168, %v167
  %v193 = vpack.c.b16 %v170, %v169
  %v194 = vpack.c.b16 %v172, %v171
  %v195 = vpack.c.b16 %v174, %v173
  %v196 = vpack.c.b16 %v176, %v175
  %v197 = vpack.c.b16 %v178, %v177
  %v198 = vpack.c.b16 %v180, %v179
  %v199 = vpack.c.b16 %v182, %v181
  %v200 = vpack.c.b16 %v184, %v183
  %v209 = vunpack.c.l.b16 %v113
  %v210 = vunpack.c.l.b16 %v114
  %v211 = vunpack.c.l.b16 %v115
  %v212 = vunpack.c.l.b16 %v116
  %v213 = vunpack.c.l.b16 %v117
  %v214 = vunpack.c.l.b16 %v118
  %v215 = vunpack.c.l.b16 %v119
  %v216 = vunpack.c.l.b16 %v120
  %v217 = vpack.c.b16 %v210, %v209
  %v218 = vpack.c.b16 %v212, %v211
  %v219 = vpack.c.b16 %v214, %v213
  %v220 = vpack.c.b16 %v216, %v215
  %vm225 = vcmask 523264
  %v227 = vsel %vm225, %v185, 0
  %v230 = vsel %vm225, %v186, 0
  %v233 = vsel %vm225, %v187, 0
  %v236 = vsel %vm225, %v188, 0
  %v239 = vsel %vm225, %v189, 0
  %v242 = vsel %vm225, %v190, 0
  %v245 = vsel %vm225, %v191, 0
  %v248 = vsel %vm225, %v192, 0
  %v251 = vsel %vm225, %v193, 0
  %v254 = vsel %vm225, %v194, 0
  %v257 = vsel %vm225, %v195, 0
  %v260 = vsel %vm225, %v196, 0
  %v263 = vsel %vm225, %v197, 0
  %v266 = vsel %vm225, %v198, 0
  %v269 = vsel %vm225, %v199, 0
  %v272 = vsel %vm225, %v200, 0
  %274 = vmatprep.subr.bf16.mxu0 0
  %275 = vmatpush1.bf16.msra.mxu0 %v217
  %276 = vmatprep.subr.bf16.mxu0 0
  %277 = vmatpush1.bf16.msra.mxu0 %v218
  %278 = vmatprep.subr.bf16.mxu0 0
  %279 = vmatpush1.bf16.msra.mxu0 %v219
  %280 = vmatprep.subr.bf16.mxu0 0
  %281 = vmatpush1.bf16.msra.mxu0 %v220
  %282 = vmatprep.subr.bf16.mxu0 0
  %283 = vmatpush1.bf16.msra.mxu0 0
  %284 = vmatprep.subr.bf16.mxu0 0
  %285 = vmatpush1.bf16.msra.mxu0 0
  %286 = vmatprep.subr.bf16.mxu0 0
  %287 = vmatpush1.bf16.msra.mxu0 0
  %288 = vmatprep.subr.bf16.mxu0 0
  %289 = vmatpush1.bf16.msra.mxu0 0
  %290 = vmatprep.subr.bf16.mxu0 0
  %291 = vmatpush1.bf16.msra.mxu0 0
  %292 = vmatprep.subr.bf16.mxu0 0
  %293 = vmatpush1.bf16.msra.mxu0 0
  %294 = vmatprep.subr.bf16.mxu0 0
  %295 = vmatpush1.bf16.msra.mxu0 0
  %296 = vmatprep.subr.bf16.mxu0 0
  %297 = vmatpush1.bf16.msra.mxu0 0
  %298 = vmatprep.subr.bf16.mxu0 0
  %299 = vmatpush1.bf16.msra.mxu0 0
  %300 = vmatprep.subr.bf16.mxu0 0
  %301 = vmatpush1.bf16.msra.mxu0 0
  %302 = vmatprep.subr.bf16.mxu0 0
  %303 = vmatpush1.bf16.msra.mxu0 0
  %304 = vmatprep.subr.bf16.mxu0 0
  %305 = vmatpush1.bf16.msra.mxu0 0
  %306 = vmatprep.mubr.bf16.mxu0 0
  %307 = vmatmul.mubr.bf16.gmra.mrb[0].mxu0 %v227
  %v308 = vpop.f32.mrb[0].mxu0
  %v309 = vadd.f32 0.0, %v308
  %v310 = vpop.f32.mrb[0].mxu0
  %v311 = vpop.f32.mrb[0].mxu0
  %v312 = vadd.f32 0.0, %v311
  %v313 = vpop.f32.mrb[0].mxu0
  %314 = vmatprep.mubr.bf16.mxu0 0
  %315 = vmatmul.mubr.bf16.gmra.mrb[0].mxu0 %v230
  %v316 = vpop.f32.mrb[0].mxu0
  %v317 = vadd.f32 0.0, %v316
  %v318 = vpop.f32.mrb[0].mxu0
  %v319 = vpop.f32.mrb[0].mxu0
  %v320 = vadd.f32 0.0, %v319
  %v321 = vpop.f32.mrb[0].mxu0
  %322 = vmatprep.mubr.bf16.mxu0 0
  %323 = vmatmul.mubr.bf16.gmra.mrb[0].mxu0 %v233
  %v324 = vpop.f32.mrb[0].mxu0
  %v325 = vadd.f32 0.0, %v324
  %v326 = vpop.f32.mrb[0].mxu0
  %v327 = vpop.f32.mrb[0].mxu0
  %v328 = vadd.f32 0.0, %v327
  %v329 = vpop.f32.mrb[0].mxu0
  %330 = vmatprep.mubr.bf16.mxu0 0
  %331 = vmatmul.mubr.bf16.gmra.mrb[0].mxu0 %v236
  %v332 = vpop.f32.mrb[0].mxu0
  %v333 = vadd.f32 0.0, %v332
  %v334 = vpop.f32.mrb[0].mxu0
  %v335 = vpop.f32.mrb[0].mxu0
  %v336 = vadd.f32 0.0, %v335
  %v337 = vpop.f32.mrb[0].mxu0
  %338 = vmatprep.mubr.bf16.mxu0 0
  %339 = vmatmul.mubr.bf16.gmra.mrb[0].mxu0 %v239
  %v340 = vpop.f32.mrb[0].mxu0
  %v341 = vadd.f32 0.0, %v340
  %v342 = vpop.f32.mrb[0].mxu0
  %v343 = vpop.f32.mrb[0].mxu0
  %v344 = vadd.f32 0.0, %v343
  %v345 = vpop.f32.mrb[0].mxu0
  %346 = vmatprep.mubr.bf16.mxu0 0
  %347 = vmatmul.mubr.bf16.gmra.mrb[0].mxu0 %v242
  %v348 = vpop.f32.mrb[0].mxu0
  %v349 = vadd.f32 0.0, %v348
  %v350 = vpop.f32.mrb[0].mxu0
  %v351 = vpop.f32.mrb[0].mxu0
  %v352 = vadd.f32 0.0, %v351
  %v353 = vpop.f32.mrb[0].mxu0
  %354 = vmatprep.mubr.bf16.mxu0 0
  %355 = vmatmul.mubr.bf16.gmra.mrb[0].mxu0 %v245
  %v356 = vpop.f32.mrb[0].mxu0
  %v357 = vadd.f32 0.0, %v356
  %v358 = vpop.f32.mrb[0].mxu0
  %v359 = vpop.f32.mrb[0].mxu0
  %v360 = vadd.f32 0.0, %v359
  %v361 = vpop.f32.mrb[0].mxu0
  %362 = vmatprep.mubr.bf16.mxu0 0
  %363 = vmatmul.mubr.bf16.gmra.mrb[0].mxu0 %v248
  %v364 = vpop.f32.mrb[0].mxu0
  %v365 = vadd.f32 0.0, %v364
  %v366 = vpop.f32.mrb[0].mxu0
  %v367 = vpop.f32.mrb[0].mxu0
  %v368 = vadd.f32 0.0, %v367
  %v369 = vpop.f32.mrb[0].mxu0
  %370 = vmatprep.mubr.bf16.mxu0 0
  %371 = vmatmul.mubr.bf16.gmra.mrb[0].mxu0 %v251
  %v372 = vpop.f32.mrb[0].mxu0
  %v373 = vadd.f32 0.0, %v372
  %v374 = vpop.f32.mrb[0].mxu0
  %v375 = vpop.f32.mrb[0].mxu0
  %v376 = vadd.f32 0.0, %v375
  %v377 = vpop.f32.mrb[0].mxu0
  %378 = vmatprep.mubr.bf16.mxu0 0
  %379 = vmatmul.mubr.bf16.gmra.mrb[0].mxu0 %v254
  %v380 = vpop.f32.mrb[0].mxu0
  %v381 = vadd.f32 0.0, %v380
  %v382 = vpop.f32.mrb[0].mxu0
  %v383 = vpop.f32.mrb[0].mxu0
  %v384 = vadd.f32 0.0, %v383
  %v385 = vpop.f32.mrb[0].mxu0
  %386 = vmatprep.mubr.bf16.mxu0 0
  %387 = vmatmul.mubr.bf16.gmra.mrb[0].mxu0 %v257
  %v388 = vpop.f32.mrb[0].mxu0
  %v389 = vadd.f32 0.0, %v388
  %v390 = vpop.f32.mrb[0].mxu0
  %v391 = vpop.f32.mrb[0].mxu0
  %v392 = vadd.f32 0.0, %v391
  %v393 = vpop.f32.mrb[0].mxu0
  %394 = vmatprep.mubr.bf16.mxu0 0
  %395 = vmatmul.mubr.bf16.gmra.mrb[0].mxu0 %v260
  %v396 = vpop.f32.mrb[0].mxu0
  %v397 = vadd.f32 0.0, %v396
  %v398 = vpop.f32.mrb[0].mxu0
  %v399 = vpop.f32.mrb[0].mxu0
  %v400 = vadd.f32 0.0, %v399
  %v401 = vpop.f32.mrb[0].mxu0
  %402 = vmatprep.mubr.bf16.mxu0 0
  %403 = vmatmul.mubr.bf16.gmra.mrb[0].mxu0 %v263
  %v404 = vpop.f32.mrb[0].mxu0
  %v405 = vadd.f32 0.0, %v404
  %v406 = vpop.f32.mrb[0].mxu0
  %v407 = vpop.f32.mrb[0].mxu0
  %v408 = vadd.f32 0.0, %v407
  %v409 = vpop.f32.mrb[0].mxu0
  %410 = vmatprep.mubr.bf16.mxu0 0
  %411 = vmatmul.mubr.bf16.gmra.mrb[0].mxu0 %v266
  %v412 = vpop.f32.mrb[0].mxu0
  %v413 = vadd.f32 0.0, %v412
  %v414 = vpop.f32.mrb[0].mxu0
  %v415 = vpop.f32.mrb[0].mxu0
  %v416 = vadd.f32 0.0, %v415
  %v417 = vpop.f32.mrb[0].mxu0
  %418 = vmatprep.mubr.bf16.mxu0 0
  %419 = vmatmul.mubr.bf16.gmra.mrb[0].mxu0 %v269
  %v420 = vpop.f32.mrb[0].mxu0
  %v421 = vadd.f32 0.0, %v420
  %v422 = vpop.f32.mrb[0].mxu0
  %v423 = vpop.f32.mrb[0].mxu0
  %v424 = vadd.f32 0.0, %v423
  %v425 = vpop.f32.mrb[0].mxu0
  %426 = vmatprep.mubr.bf16.mxu0 0
  %427 = vmatmul.mubr.bf16.gmra.mrb[0].mxu0 %v272
  %v428 = vpop.f32.mrb[0].mxu0
  %v429 = vadd.f32 0.0, %v428
  %v430 = vpop.f32.mrb[0].mxu0
  %v431 = vpop.f32.mrb[0].mxu0
  %v432 = vadd.f32 0.0, %v431
  %v433 = vpop.f32.mrb[0].mxu0
  %434 = vdwg.mxu0
  %v435 = vadd.f32 %v49, %v309
  %v436 = vadd.f32 %v50, %v312
  %v437 = vadd.f32 %v51, %v317
  %v438 = vadd.f32 %v52, %v320
  %v439 = vadd.f32 %v53, %v325
  %v440 = vadd.f32 %v54, %v328
  %v441 = vadd.f32 %v55, %v333
  %v442 = vadd.f32 %v56, %v336
  %v443 = vadd.f32 %v57, %v341
  %v444 = vadd.f32 %v58, %v344
  %v445 = vadd.f32 %v59, %v349
  %v446 = vadd.f32 %v60, %v352
  %v447 = vadd.f32 %v61, %v357
  %v448 = vadd.f32 %v62, %v360
  %v449 = vadd.f32 %v63, %v365
  %v450 = vadd.f32 %v64, %v368
  %v451 = vadd.f32 %v65, %v373
  %v452 = vadd.f32 %v66, %v376
  %v453 = vadd.f32 %v67, %v381
  %v454 = vadd.f32 %v68, %v384
  %v455 = vadd.f32 %v69, %v389
  %v456 = vadd.f32 %v70, %v392
  %v457 = vadd.f32 %v71, %v397
  %v458 = vadd.f32 %v72, %v400
  %v459 = vadd.f32 %v73, %v405
  %v460 = vadd.f32 %v74, %v408
  %v461 = vadd.f32 %v75, %v413
  %v462 = vadd.f32 %v76, %v416
  %v463 = vadd.f32 %v77, %v421
  %v464 = vadd.f32 %v78, %v424
  %v465 = vadd.f32 %v79, %v429
  %v466 = vadd.f32 %v80, %v432
  %467 = vst.msk [vmem:[#allocation2] sm:$0xff] %vm225, %v435
  %468 = vst.msk [vmem:[#allocation2 + $0x8] sm:$0xff] %vm225, %v436
  %469 = vst.msk [vmem:[#allocation2 + $0x10] sm:$0xff] %vm225, %v437
  %470 = vst.msk [vmem:[#allocation2 + $0x18] sm:$0xff] %vm225, %v438
  %471 = vst.msk [vmem:[#allocation2 + $0x20] sm:$0xff] %vm225, %v439
  %472 = vst.msk [vmem:[#allocation2 + $0x28] sm:$0xff] %vm225, %v440
  %473 = vst.msk [vmem:[#allocation2 + $0x30] sm:$0xff] %vm225, %v441
  %474 = vst.msk [vmem:[#allocation2 + $0x38] sm:$0xff] %vm225, %v442
  %475 = vst.msk [vmem:[#allocation2 + $0x40] sm:$0xff] %vm225, %v443
  %476 = vst.msk [vmem:[#allocation2 + $0x48] sm:$0xff] %vm225, %v444
  %477 = vst.msk [vmem:[#allocation2 + $0x50] sm:$0xff] %vm225, %v445
  %478 = vst.msk [vmem:[#allocation2 + $0x58] sm:$0xff] %vm225, %v446
  %479 = vst.msk [vmem:[#allocation2 + $0x60] sm:$0xff] %vm225, %v447
  %480 = vst.msk [vmem:[#allocation2 + $0x68] sm:$0xff] %vm225, %v448
  %481 = vst.msk [vmem:[#allocation2 + $0x70] sm:$0xff] %vm225, %v449
  %482 = vst.msk [vmem:[#allocation2 + $0x78] sm:$0xff] %vm225, %v450
  %483 = vst.msk [vmem:[#allocation2 + $0x80] sm:$0xff] %vm225, %v451
  %484 = vst.msk [vmem:[#allocation2 + $0x88] sm:$0xff] %vm225, %v452
  %485 = vst.msk [vmem:[#allocation2 + $0x90] sm:$0xff] %vm225, %v453
  %486 = vst.msk [vmem:[#allocation2 + $0x98] sm:$0xff] %vm225, %v454
  %487 = vst.msk [vmem:[#allocation2 + $0xa0] sm:$0xff] %vm225, %v455
  %488 = vst.msk [vmem:[#allocation2 + $0xa8] sm:$0xff] %vm225, %v456
  %489 = vst.msk [vmem:[#allocation2 + $0xb0] sm:$0xff] %vm225, %v457
  %490 = vst.msk [vmem:[#allocation2 + $0xb8] sm:$0xff] %vm225, %v458
  %491 = vst.msk [vmem:[#allocation2 + $0xc0] sm:$0xff] %vm225, %v459
  %492 = vst.msk [vmem:[#allocation2 + $0xc8] sm:$0xff] %vm225, %v460
  %493 = vst.msk [vmem:[#allocation2 + $0xd0] sm:$0xff] %vm225, %v461
  %494 = vst.msk [vmem:[#allocation2 + $0xd8] sm:$0xff] %vm225, %v462
  %495 = vst.msk [vmem:[#allocation2 + $0xe0] sm:$0xff] %vm225, %v463
  %496 = vst.msk [vmem:[#allocation2 + $0xe8] sm:$0xff] %vm225, %v464
  %497 = vst.msk [vmem:[#allocation2 + $0xf0] sm:$0xff] %vm225, %v465
  %498 = vst.msk [vmem:[#allocation2 + $0xf8] sm:$0xff] %vm225, %v466
  // Predicated region
  $region14: #{tpu_custom_call.1} parent=0 // pred_check
    %p499 = pneg %p12
  $region15: #{tpu_custom_call.1} parent=0 // pred_check_branch
    %501 = sbr.rel (%p499) target = $region17
  $region16: #{tpu_custom_call.1} parent=0 // pred_region
    %v502 = vld [vmem:[#allocation2] sm:$0xff]
    %v503 = vld [vmem:[#allocation2 + $0x8] sm:$0xff]
    %v504 = vld [vmem:[#allocation2 + $0x10] sm:$0xff]
    %v505 = vld [vmem:[#allocation2 + $0x18] sm:$0xff]
    %v506 = vld [vmem:[#allocation2 + $0x20] sm:$0xff]
    %v507 = vld [vmem:[#allocation2 + $0x28] sm:$0xff]
    %v508 = vld [vmem:[#allocation2 + $0x30] sm:$0xff]
    %v509 = vld [vmem:[#allocation2 + $0x38] sm:$0xff]
    %v510 = vld [vmem:[#allocation2 + $0x40] sm:$0xff]
    %v511 = vld [vmem:[#allocation2 + $0x48] sm:$0xff]
    %v512 = vld [vmem:[#allocation2 + $0x50] sm:$0xff]
    %v513 = vld [vmem:[#allocation2 + $0x58] sm:$0xff]
    %v514 = vld [vmem:[#allocation2 + $0x60] sm:$0xff]
    %v515 = vld [vmem:[#allocation2 + $0x68] sm:$0xff]
    %v516 = vld [vmem:[#allocation2 + $0x70] sm:$0xff]
    %v517 = vld [vmem:[#allocation2 + $0x78] sm:$0xff]
    %v518 = vld [vmem:[#allocation2 + $0x80] sm:$0xff]
    %v519 = vld [vmem:[#allocation2 + $0x88] sm:$0xff]
    %v520 = vld [vmem:[#allocation2 + $0x90] sm:$0xff]
    %v521 = vld [vmem:[#allocation2 + $0x98] sm:$0xff]
    %v522 = vld [vmem:[#allocation2 + $0xa0] sm:$0xff]
    %v523 = vld [vmem:[#allocation2 + $0xa8] sm:$0xff]
    %v524 = vld [vmem:[#allocation2 + $0xb0] sm:$0xff]
    %v525 = vld [vmem:[#allocation2 + $0xb8] sm:$0xff]
    %v526 = vld [vmem:[#allocation2 + $0xc0] sm:$0xff]
    %v527 = vld [vmem:[#allocation2 + $0xc8] sm:$0xff]
    %v528 = vld [vmem:[#allocation2 + $0xd0] sm:$0xff]
    %v529 = vld [vmem:[#allocation2 + $0xd8] sm:$0xff]
    %v530 = vld [vmem:[#allocation2 + $0xe0] sm:$0xff]
    %v531 = vld [vmem:[#allocation2 + $0xe8] sm:$0xff]
    %v532 = vld [vmem:[#allocation2 + $0xf0] sm:$0xff]
    %v533 = vld [vmem:[#allocation2 + $0xf8] sm:$0xff]
    %v534 = vpack.c.bf16 %v503, %v502
    %v535 = vpack.c.bf16 %v505, %v504
    %v536 = vpack.c.bf16 %v507, %v506
    %v537 = vpack.c.bf16 %v509, %v508
    %v538 = vpack.c.bf16 %v511, %v510
    %v539 = vpack.c.bf16 %v513, %v512
    %v540 = vpack.c.bf16 %v515, %v514
    %v541 = vpack.c.bf16 %v517, %v516
    %v542 = vpack.c.bf16 %v519, %v518
    %v543 = vpack.c.bf16 %v521, %v520
    %v544 = vpack.c.bf16 %v523, %v522
    %v545 = vpack.c.bf16 %v525, %v524
    %v546 = vpack.c.bf16 %v527, %v526
    %v547 = vpack.c.bf16 %v529, %v528
    %v548 = vpack.c.bf16 %v531, %v530
    %v549 = vpack.c.bf16 %v533, %v532
    %v566 = vunpack.c.l.b16 %v534
    %v567 = vunpack.c.h.b16 %v534
    %v568 = vunpack.c.l.b16 %v535
    %v569 = vunpack.c.h.b16 %v535
    %v570 = vunpack.c.l.b16 %v536
    %v571 = vunpack.c.h.b16 %v536
    %v572 = vunpack.c.l.b16 %v537
    %v573 = vunpack.c.h.b16 %v537
    %v574 = vunpack.c.l.b16 %v538
    %v575 = vunpack.c.h.b16 %v538
    %v576 = vunpack.c.l.b16 %v539
    %v577 = vunpack.c.h.b16 %v539
    %v578 = vunpack.c.l.b16 %v540
    %v579 = vunpack.c.h.b16 %v540
    %v580 = vunpack.c.l.b16 %v541
    %v581 = vunpack.c.h.b16 %v541
    %v582 = vunpack.c.l.b16 %v542
    %v583 = vunpack.c.h.b16 %v542
    %v584 = vunpack.c.l.b16 %v543
    %v585 = vunpack.c.h.b16 %v543
    %v586 = vunpack.c.l.b16 %v544
    %v587 = vunpack.c.h.b16 %v544
    %v588 = vunpack.c.l.b16 %v545
    %v589 = vunpack.c.h.b16 %v545
    %v590 = vunpack.c.l.b16 %v546
    %v591 = vunpack.c.h.b16 %v546
    %v592 = vunpack.c.l.b16 %v547
    %v593 = vunpack.c.h.b16 %v547
    %v594 = vunpack.c.l.b16 %v548
    %v595 = vunpack.c.h.b16 %v548
    %v596 = vunpack.c.l.b16 %v549
    %v597 = vunpack.c.h.b16 %v549
    %v598 = vpack.c.b16 %v566, %v566
    %v599 = vpack.c.b16 %v567, %v567
    %v600 = vpack.c.b16 %v568, %v568
    %v601 = vpack.c.b16 %v569, %v569
    %v602 = vpack.c.b16 %v570, %v570
    %v603 = vpack.c.b16 %v571, %v571
    %v604 = vpack.c.b16 %v572, %v572
    %v605 = vpack.c.b16 %v573, %v573
    %v606 = vpack.c.b16 %v574, %v574
    %v607 = vpack.c.b16 %v575, %v575
    %v608 = vpack.c.b16 %v576, %v576
    %v609 = vpack.c.b16 %v577, %v577
    %v610 = vpack.c.b16 %v578, %v578
    %v611 = vpack.c.b16 %v579, %v579
    %v612 = vpack.c.b16 %v580, %v580
    %v613 = vpack.c.b16 %v581, %v581
    %v614 = vpack.c.b16 %v582, %v582
    %v615 = vpack.c.b16 %v583, %v583
    %v616 = vpack.c.b16 %v584, %v584
    %v617 = vpack.c.b16 %v585, %v585
    %v618 = vpack.c.b16 %v586, %v586
    %v619 = vpack.c.b16 %v587, %v587
    %v620 = vpack.c.b16 %v588, %v588
    %v621 = vpack.c.b16 %v589, %v589
    %v622 = vpack.c.b16 %v590, %v590
    %v623 = vpack.c.b16 %v591, %v591
    %v624 = vpack.c.b16 %v592, %v592
    %v625 = vpack.c.b16 %v593, %v593
    %v626 = vpack.c.b16 %v594, %v594
    %v627 = vpack.c.b16 %v595, %v595
    %v628 = vpack.c.b16 %v596, %v596
    %v629 = vpack.c.b16 %v597, %v597
    %vm662 = vcmask 519168
    %663 = vst.msk [vmem:[%s2] sm:$0xf] %vm662, %v598
    %664 = vst.msk [vmem:[%s2 + $0x4] sm:$0xf] %vm662, %v599
    %665 = vst.msk [vmem:[%s2 + $0x8] sm:$0xf] %vm662, %v600
    %666 = vst.msk [vmem:[%s2 + $0xc] sm:$0xf] %vm662, %v601
    %667 = vst.msk [vmem:[%s2 + $0x10] sm:$0xf] %vm662, %v602
    %668 = vst.msk [vmem:[%s2 + $0x14] sm:$0xf] %vm662, %v603
    %669 = vst.msk [vmem:[%s2 + $0x18] sm:$0xf] %vm662, %v604
    %670 = vst.msk [vmem:[%s2 + $0x1c] sm:$0xf] %vm662, %v605
    %671 = vst.msk [vmem:[%s2 + $0x20] sm:$0xf] %vm662, %v606
    %672 = vst.msk [vmem:[%s2 + $0x24] sm:$0xf] %vm662, %v607
    %673 = vst.msk [vmem:[%s2 + $0x28] sm:$0xf] %vm662, %v608
    %674 = vst.msk [vmem:[%s2 + $0x2c] sm:$0xf] %vm662, %v609
    %675 = vst.msk [vmem:[%s2 + $0x30] sm:$0xf] %vm662, %v610
    %676 = vst.msk [vmem:[%s2 + $0x34] sm:$0xf] %vm662, %v611
    %677 = vst.msk [vmem:[%s2 + $0x38] sm:$0xf] %vm662, %v612
    %678 = vst.msk [vmem:[%s2 + $0x3c] sm:$0xf] %vm662, %v613
    %679 = vst.msk [vmem:[%s2 + $0x40] sm:$0xf] %vm662, %v614
    %680 = vst.msk [vmem:[%s2 + $0x44] sm:$0xf] %vm662, %v615
    %681 = vst.msk [vmem:[%s2 + $0x48] sm:$0xf] %vm662, %v616
    %682 = vst.msk [vmem:[%s2 + $0x4c] sm:$0xf] %vm662, %v617
    %683 = vst.msk [vmem:[%s2 + $0x50] sm:$0xf] %vm662, %v618
    %684 = vst.msk [vmem:[%s2 + $0x54] sm:$0xf] %vm662, %v619
    %685 = vst.msk [vmem:[%s2 + $0x58] sm:$0xf] %vm662, %v620
    %686 = vst.msk [vmem:[%s2 + $0x5c] sm:$0xf] %vm662, %v621
    %687 = vst.msk [vmem:[%s2 + $0x60] sm:$0xf] %vm662, %v622
    %688 = vst.msk [vmem:[%s2 + $0x64] sm:$0xf] %vm662, %v623
    %689 = vst.msk [vmem:[%s2 + $0x68] sm:$0xf] %vm662, %v624
    %690 = vst.msk [vmem:[%s2 + $0x6c] sm:$0xf] %vm662, %v625
    %691 = vst.msk [vmem:[%s2 + $0x70] sm:$0xf] %vm662, %v626
    %692 = vst.msk [vmem:[%s2 + $0x74] sm:$0xf] %vm662, %v627
    %693 = vst.msk [vmem:[%s2 + $0x78] sm:$0xf] %vm662, %v628
    %694 = vst.msk [vmem:[%s2 + $0x7c] sm:$0xf] %vm662, %v629
  $region17: #{tpu_custom_call.1} parent=0 // pred_fallthru
    _
  // Predicated region
  $region18: #{tpu_custom_call.1} parent=0 // pred_check
    _
  $region19: #{tpu_custom_call.1} parent=0 // pred_check_branch
    %696 = sbr.rel (0) target = $region21
  $region20: #{tpu_custom_call.1} parent=0 // pred_region
    _
  $region21: #{tpu_custom_call.1} parent=0 // pred_fallthru
    _
  // Predicated region
  $region22: #{tpu_custom_call.1} parent=0 // pred_check
    _
  $region23: #{tpu_custom_call.1} parent=0 // pred_check_branch
    %698 = sbr.rel (0) target = $region25
  $region24: #{tpu_custom_call.1} parent=0 // pred_region
    _
  $region25: #{tpu_custom_call.1} parent=0 // pred_fallthru
    _

</llo_original>
